<compile_context>
chip_gen: v7x
topology: tpu7x:2x2x1
jax: 0.10.0
libtpu: 0.0.40
codegen_flags: <defaults>
</compile_context>

<pallas_src>
import functools

import jax
import jax.numpy as jnp
from jax.experimental import pallas as pl
from jax.experimental.pallas import tpu as pltpu

NEG_SLOPE = 0.01  # torch.nn.LeakyReLU default negative_slope


def conv1d_sn_lrelu_kernel(x_ref, w_ref, b_ref, o_ref):
    # x_ref: (1, L_p, C)      padded activation row-block for one batch element
    # w_ref: (K, C, C_out)    spectrally-normalized weight (resident)
    # b_ref: (1, C_out)       bias (f32, resident)
    # o_ref: (1, L_out, C_out) output (f32) — exactly the useful bytes, no lane padding
    l_out = o_ref.shape[1]
    c_out = o_ref.shape[2]
    k_size = w_ref.shape[0]

    x = x_ref[0].astype(w_ref.dtype)  # (L_p, C); cast (if bf16) is a free VPU op

    # In-kernel im2col: K shifted matmuls accumulated in f32 (MXU has slack).
    acc = jnp.zeros((l_out, c_out), jnp.float32)
    for k in range(k_size):  # static, small K
        acc = acc + jnp.dot(
            x[k:k + l_out, :], w_ref[k], preferred_element_type=jnp.float32
        )

    acc = acc + b_ref[...]  # (1, C_out) broadcasts over rows
    o_ref[0] = jnp.where(acc >= 0.0, acc, NEG_SLOPE * acc).astype(o_ref.dtype)


def prepare_conv_params(weight, bias, compute_dtype=jnp.float32):
    """Spectral-norm + repack the Conv1d weight for the kernel.

    Hoisted out of the forward hot path: call once per weight update.
    weight: torch layout (C_out, C_in, K); bias: (C_out,).
    Returns (w_k (K, C_in, C_out), b2 (1, C_out), kernel_size).
    """
    c_out, c_in, k = weight.shape
    # TODO(synk): PyTorch's spectral_norm uses one power iteration per training
    # step from a persistent u buffer; here we use the exact top singular value
    # (the converged fixed point of that iteration).
    w_mat = weight.reshape(c_out, -1)
    sigma = jnp.linalg.svd(w_mat, compute_uv=False)[0]
    w_sn = weight / sigma
    # (C_out, C_in, K) -> (K, C_in, C_out): w_k[k, ci, co] = weight[co, ci, k]
    w_k = jnp.transpose(w_sn, (2, 1, 0)).astype(compute_dtype)
    b2 = bias.reshape(1, c_out).astype(jnp.float32)
    return w_k, b2, k


@functools.partial(jax.jit, static_argnames=("kernel_size",))
def conv_layer_forward(x, w_k, b2, kernel_size):
    """x: (B, L, C) f32; w_k/b2 from prepare_conv_params. Returns (B, L_out, C_out) f32."""
    B, L, C = x.shape
    K = kernel_size
    pad = (K - 1) // 2
    # ConstantPad1d(0.0) on both sides of the time axis (the only wrapper-side
    # layout op left; the K-fold im2col expansion now happens in VMEM/vregs).
    x_p = jnp.pad(x, ((0, 0), (pad, pad), (0, 0)))
    L_p = L + 2 * pad
    L_out = L_p - K + 1  # == L for odd K
    C_out = w_k.shape[2]

    # Advisory cost estimate so XLA can overlap surrounding ops with the kernel.
    cost = pl.CostEstimate(
        flops=2 * B * L_out * K * C * C_out,
        transcendentals=0,
        bytes_accessed=int(
            x_p.size * x_p.dtype.itemsize
            + w_k.size * w_k.dtype.itemsize
            + b2.size * 4
            + B * L_out * C_out * 4
        ),
    )

    # VMEM budget derived from actual block bytes (double-buffered x/out blocks
    # + resident weight/bias), with headroom; clamped below v7x's 64 MiB/TC.
    block_bytes = (
        2 * L_p * C * x_p.dtype.itemsize
        + 2 * L_out * C_out * 4
        + 2 * (w_k.size * w_k.dtype.itemsize + b2.size * 4)
    )
    vmem_limit = min(max(int(block_bytes) + (8 << 20), 16 << 20), 48 << 20)

    # TODO(synk): for very long sequences, tile L with halo'd manual DMA
    # (memory_space=pl.ANY + pltpu.make_async_copy) instead of one full
    # (L_p, C) row-block per batch element.
    # TODO(synk): on v7x with large channel counts, single-buffer the resident
    # weight block (pipeline_mode=pl.Buffered(1)) to free VMEM for bigger tiles.
    out = pl.pallas_call(
        conv1d_sn_lrelu_kernel,
        out_shape=jax.ShapeDtypeStruct((B, L_out, C_out), jnp.float32),
        grid=(B,),
        in_specs=[
            pl.BlockSpec((1, L_p, C), lambda b: (b, 0, 0)),      # activation row-block
            pl.BlockSpec((K, C, C_out), lambda b: (0, 0, 0)),    # weight (resident)
            pl.BlockSpec((1, C_out), lambda b: (0, 0)),          # bias (resident)
        ],
        out_specs=pl.BlockSpec((1, L_out, C_out), lambda b: (b, 0, 0)),
        compiler_params=pltpu.CompilerParams(
            dimension_semantics=("parallel",),  # batches shard across v7x's 2 TCs
            vmem_limit_bytes=vmem_limit,
        ),
        cost_estimate=cost,
    )(x_p, w_k, b2)
    return out


def _reference(x, weight, bias, kernel_size):
    """Pure-JAX f32 reference mirroring the PyTorch forward."""
    pad = (kernel_size - 1) // 2
    w_mat = weight.reshape(weight.shape[0], -1)
    sigma = jnp.linalg.svd(w_mat, compute_uv=False)[0]
    w_sn = weight / sigma
    x_ncw = jnp.transpose(x, (0, 2, 1))  # (B, C, L)
    x_ncw = jnp.pad(x_ncw, ((0, 0), (0, 0), (pad, pad)))
    y = jax.lax.conv_general_dilated(
        x_ncw, w_sn, window_strides=(1,), padding="VALID",
        dimension_numbers=("NCH", "OIH", "NCH"))
    y = y + bias[None, :, None]
    y = jnp.where(y >= 0.0, y, NEG_SLOPE * y)
    return jnp.transpose(y, (0, 2, 1))  # (B, L, C)


if __name__ == "__main__":
    B, window_size, n_features, kernel_size = 2, 16, 4, 7

    key = jax.random.PRNGKey(0)
    kx, kw, kb = jax.random.split(key, 3)
    x = jax.random.normal(kx, (B, window_size, n_features), dtype=jnp.float32)
    # Conv1d weight layout (out_channels, in_channels, kernel_size); deterministic init.
    weight = jax.random.normal(
        kw, (n_features, n_features, kernel_size), dtype=jnp.float32) * 0.1
    bias = jax.random.normal(kb, (n_features,), dtype=jnp.float32) * 0.1

    ref = _reference(x, weight, bias, kernel_size)

    # f32 compute path (tolerance allows for TPU default matmul precision).
    w32, b32, _ = prepare_conv_params(weight, bias, compute_dtype=jnp.float32)
    out32 = jax.block_until_ready(conv_layer_forward(x, w32, b32, kernel_size))
    assert out32.shape == (B, window_size, n_features)
    assert jnp.allclose(out32, ref, atol=1e-2, rtol=1e-2)

    # bf16 weight path (activations cast to bf16 in-kernel, f32 accumulate).
    wbf, bbf, _ = prepare_conv_params(weight, bias, compute_dtype=jnp.bfloat16)
    outbf = jax.block_until_ready(conv_layer_forward(x, wbf, bbf, kernel_size))
    assert outbf.shape == (B, window_size, n_features)
    assert jnp.allclose(outbf, ref, atol=5e-2, rtol=5e-2)

    print("KERNEL_OK")
</pallas_src>

<mosaic_0001>
module attributes {stable_mosaic.version = 11 : i64} {
  func.func @conv1d_sn_lrelu_kernel(%arg0: i32, %arg1: memref<1x22x4xf32, #tpu.memory_space<vmem>>, %arg2: memref<7x4x4xf32, #tpu.memory_space<vmem>>, %arg3: memref<1x4xf32, #tpu.memory_space<vmem>>, %arg4: memref<1x16x4xf32, #tpu.memory_space<vmem>>) attributes {dimension_semantics = [#tpu.dimension_semantics<parallel>], iteration_bounds = array<i64: 2>, scalar_prefetch = 0 : i64, scratch_operands = 0 : i64, tpu.core_type = #tpu.core_type<tc>, window_params = [{transform_indices = @transform_0, window_bounds = array<i64: 1, 22, 4>}, {pipeline_mode = #tpu.pipeline_mode<synchronous>, transform_indices = @transform_1, window_bounds = array<i64: 7, 4, 4>}, {pipeline_mode = #tpu.pipeline_mode<synchronous>, transform_indices = @transform_2, window_bounds = array<i64: 1, 4>}, {transform_indices = @transform_3, window_bounds = array<i64: 1, 16, 4>}]} {
    %c0 = arith.constant 0 : index
    %c0_0 = arith.constant 0 : index
    %c0_1 = arith.constant 0 : index
    %0 = vector.load %arg1[%c0, %c0_0, %c0_1] : memref<1x22x4xf32, #tpu.memory_space<vmem>>, vector<1x22x4xf32>
    %1 = vector.shape_cast %0 : vector<1x22x4xf32> to vector<22x4xf32>
    %cst = arith.constant 0.000000e+00 : f32
    %2 = vector.broadcast %cst : f32 to vector<16x4xf32>
    %3 = vector.extract_strided_slice %1 {offsets = [0, 0], sizes = [16, 4], strides = [1, 1]} : vector<22x4xf32> to vector<16x4xf32>
    %c0_2 = arith.constant 0 : index
    %c0_3 = arith.constant 0 : index
    %c0_4 = arith.constant 0 : index
    %4 = vector.load %arg2[%c0_2, %c0_3, %c0_4] : memref<7x4x4xf32, #tpu.memory_space<vmem>>, vector<1x4x4xf32>
    %5 = vector.shape_cast %4 : vector<1x4x4xf32> to vector<4x4xf32>
    %cst_5 = arith.constant dense<0.000000e+00> : vector<16x4xf32>
    %6 = tpu.matmul %3, %5, %cst_5 {dimension_numbers = #tpu.dot_dimension_numbers<[1], [0], [0], [1], [0, 0, 1, 1], [], []>} : vector<16x4xf32>, vector<4x4xf32>, vector<16x4xf32> -> vector<16x4xf32>
    %7 = arith.addf %2, %6 : vector<16x4xf32>
    %8 = vector.extract_strided_slice %1 {offsets = [1, 0], sizes = [16, 4], strides = [1, 1]} : vector<22x4xf32> to vector<16x4xf32>
    %c1 = arith.constant 1 : index
    %c0_6 = arith.constant 0 : index
    %c0_7 = arith.constant 0 : index
    %9 = vector.load %arg2[%c1, %c0_6, %c0_7] : memref<7x4x4xf32, #tpu.memory_space<vmem>>, vector<1x4x4xf32>
    %10 = vector.shape_cast %9 : vector<1x4x4xf32> to vector<4x4xf32>
    %cst_8 = arith.constant dense<0.000000e+00> : vector<16x4xf32>
    %11 = tpu.matmul %8, %10, %cst_8 {dimension_numbers = #tpu.dot_dimension_numbers<[1], [0], [0], [1], [0, 0, 1, 1], [], []>} : vector<16x4xf32>, vector<4x4xf32>, vector<16x4xf32> -> vector<16x4xf32>
    %12 = arith.addf %7, %11 : vector<16x4xf32>
    %13 = vector.extract_strided_slice %1 {offsets = [2, 0], sizes = [16, 4], strides = [1, 1]} : vector<22x4xf32> to vector<16x4xf32>
    %c2 = arith.constant 2 : index
    %c0_9 = arith.constant 0 : index
    %c0_10 = arith.constant 0 : index
    %14 = vector.load %arg2[%c2, %c0_9, %c0_10] : memref<7x4x4xf32, #tpu.memory_space<vmem>>, vector<1x4x4xf32>
    %15 = vector.shape_cast %14 : vector<1x4x4xf32> to vector<4x4xf32>
    %cst_11 = arith.constant dense<0.000000e+00> : vector<16x4xf32>
    %16 = tpu.matmul %13, %15, %cst_11 {dimension_numbers = #tpu.dot_dimension_numbers<[1], [0], [0], [1], [0, 0, 1, 1], [], []>} : vector<16x4xf32>, vector<4x4xf32>, vector<16x4xf32> -> vector<16x4xf32>
    %17 = arith.addf %12, %16 : vector<16x4xf32>
    %18 = vector.extract_strided_slice %1 {offsets = [3, 0], sizes = [16, 4], strides = [1, 1]} : vector<22x4xf32> to vector<16x4xf32>
    %c3 = arith.constant 3 : index
    %c0_12 = arith.constant 0 : index
    %c0_13 = arith.constant 0 : index
    %19 = vector.load %arg2[%c3, %c0_12, %c0_13] : memref<7x4x4xf32, #tpu.memory_space<vmem>>, vector<1x4x4xf32>
    %20 = vector.shape_cast %19 : vector<1x4x4xf32> to vector<4x4xf32>
    %cst_14 = arith.constant dense<0.000000e+00> : vector<16x4xf32>
    %21 = tpu.matmul %18, %20, %cst_14 {dimension_numbers = #tpu.dot_dimension_numbers<[1], [0], [0], [1], [0, 0, 1, 1], [], []>} : vector<16x4xf32>, vector<4x4xf32>, vector<16x4xf32> -> vector<16x4xf32>
    %22 = arith.addf %17, %21 : vector<16x4xf32>
    %23 = vector.extract_strided_slice %1 {offsets = [4, 0], sizes = [16, 4], strides = [1, 1]} : vector<22x4xf32> to vector<16x4xf32>
    %c4 = arith.constant 4 : index
    %c0_15 = arith.constant 0 : index
    %c0_16 = arith.constant 0 : index
    %24 = vector.load %arg2[%c4, %c0_15, %c0_16] : memref<7x4x4xf32, #tpu.memory_space<vmem>>, vector<1x4x4xf32>
    %25 = vector.shape_cast %24 : vector<1x4x4xf32> to vector<4x4xf32>
    %cst_17 = arith.constant dense<0.000000e+00> : vector<16x4xf32>
    %26 = tpu.matmul %23, %25, %cst_17 {dimension_numbers = #tpu.dot_dimension_numbers<[1], [0], [0], [1], [0, 0, 1, 1], [], []>} : vector<16x4xf32>, vector<4x4xf32>, vector<16x4xf32> -> vector<16x4xf32>
    %27 = arith.addf %22, %26 : vector<16x4xf32>
    %28 = vector.extract_strided_slice %1 {offsets = [5, 0], sizes = [16, 4], strides = [1, 1]} : vector<22x4xf32> to vector<16x4xf32>
    %c5 = arith.constant 5 : index
    %c0_18 = arith.constant 0 : index
    %c0_19 = arith.constant 0 : index
    %29 = vector.load %arg2[%c5, %c0_18, %c0_19] : memref<7x4x4xf32, #tpu.memory_space<vmem>>, vector<1x4x4xf32>
    %30 = vector.shape_cast %29 : vector<1x4x4xf32> to vector<4x4xf32>
    %cst_20 = arith.constant dense<0.000000e+00> : vector<16x4xf32>
    %31 = tpu.matmul %28, %30, %cst_20 {dimension_numbers = #tpu.dot_dimension_numbers<[1], [0], [0], [1], [0, 0, 1, 1], [], []>} : vector<16x4xf32>, vector<4x4xf32>, vector<16x4xf32> -> vector<16x4xf32>
    %32 = arith.addf %27, %31 : vector<16x4xf32>
    %33 = vector.extract_strided_slice %1 {offsets = [6, 0], sizes = [16, 4], strides = [1, 1]} : vector<22x4xf32> to vector<16x4xf32>
    %c6 = arith.constant 6 : index
    %c0_21 = arith.constant 0 : index
    %c0_22 = arith.constant 0 : index
    %34 = vector.load %arg2[%c6, %c0_21, %c0_22] : memref<7x4x4xf32, #tpu.memory_space<vmem>>, vector<1x4x4xf32>
    %35 = vector.shape_cast %34 : vector<1x4x4xf32> to vector<4x4xf32>
    %cst_23 = arith.constant dense<0.000000e+00> : vector<16x4xf32>
    %36 = tpu.matmul %33, %35, %cst_23 {dimension_numbers = #tpu.dot_dimension_numbers<[1], [0], [0], [1], [0, 0, 1, 1], [], []>} : vector<16x4xf32>, vector<4x4xf32>, vector<16x4xf32> -> vector<16x4xf32>
    %37 = arith.addf %32, %36 : vector<16x4xf32>
    %c0_24 = arith.constant 0 : index
    %c0_25 = arith.constant 0 : index
    %38 = vector.load %arg3[%c0_24, %c0_25] : memref<1x4xf32, #tpu.memory_space<vmem>>, vector<1x4xf32>
    %39 = vector.broadcast %38 : vector<1x4xf32> to vector<16x4xf32>
    %40 = arith.addf %37, %39 : vector<16x4xf32>
    %cst_26 = arith.constant 0.000000e+00 : f32
    %41 = vector.broadcast %cst_26 : f32 to vector<16x4xf32>
    %42 = arith.cmpf oge, %40, %41 : vector<16x4xf32>
    %cst_27 = arith.constant 0.00999999977 : f32
    %43 = vector.broadcast %cst_27 : f32 to vector<16x4xf32>
    %44 = arith.mulf %43, %40 : vector<16x4xf32>
    %45 = arith.select %42, %40, %44 : vector<16x4xi1>, vector<16x4xf32>
    %c0_28 = arith.constant 0 : index
    %c0_29 = arith.constant 0 : index
    %c0_30 = arith.constant 0 : index
    %46 = vector.load %arg4[%c0_28, %c0_29, %c0_30] : memref<1x16x4xf32, #tpu.memory_space<vmem>>, vector<1x16x4xf32>
    %47 = vector.shape_cast %46 : vector<1x16x4xf32> to vector<16x4xf32>
    %48 = vector.shape_cast %45 : vector<16x4xf32> to vector<1x16x4xf32>
    tpu.vector_store %arg4[%c0_28, %c0_29, %c0_30], %48 {strides = array<i32>} : memref<1x16x4xf32, #tpu.memory_space<vmem>>, vector<1x16x4xf32>,
    return
  }
  func.func @transform_0(%arg0: i32) -> (i32, i32, i32) {
    %c0_i32 = arith.constant 0 : i32
    %c0_i32_0 = arith.constant 0 : i32
    %c0_i32_1 = arith.constant 0 : i32
    return %arg0, %c0_i32, %c0_i32_0 : i32, i32, i32
  }
  func.func @transform_1(%arg0: i32) -> (i32, i32, i32) {
    %c0_i32 = arith.constant 0 : i32
    %c0_i32_0 = arith.constant 0 : i32
    %c0_i32_1 = arith.constant 0 : i32
    %c0_i32_2 = arith.constant 0 : i32
    return %c0_i32, %c0_i32_0, %c0_i32_1 : i32, i32, i32
  }
  func.func @transform_2(%arg0: i32) -> (i32, i32) {
    %c0_i32 = arith.constant 0 : i32
    %c0_i32_0 = arith.constant 0 : i32
    %c0_i32_1 = arith.constant 0 : i32
    return %c0_i32, %c0_i32_0 : i32, i32
  }
  func.func @transform_3(%arg0: i32) -> (i32, i32, i32) {
    %c0_i32 = arith.constant 0 : i32
    %c0_i32_0 = arith.constant 0 : i32
    %c0_i32_1 = arith.constant 0 : i32
    return %arg0, %c0_i32, %c0_i32_0 : i32, i32, i32
  }
}

</mosaic_0001>

<llo_original>
// kernel: conv_layer_forward.1
$region0: #{conv_layer_forward.1}
  #allocation0 [shape = 'u32[]', space=smem, size = 0x4, offset = 0x4, fixed_abs, tag = 'smem constant byte address 0x4 - core index']
  #allocation1 [shape = 'u32[144,128]{1,0:T(1,128)}', space=vmem, size = 0x12000, scoped, tag = 'internal scratch']
  %s0 = inlined_call_operand.vmem [shape: f32[2,22,4], index: 0, kind: input, shape index: {}]
  %s1 = inlined_call_operand.vmem [shape: f32[7,4,4], index: 1, kind: input, shape index: {}]
  %s2 = inlined_call_operand.vmem [shape: f32[1,4], index: 2, kind: input, shape index: {}]
  %s3 = inlined_call_operand.vmem [shape: f32[2,16,4], index: 3, kind: output, shape index: {}]
  %s4 = sld [smem:[#allocation0]]
  $region45: #{conv_layer_forward.1} parent=0
    _
  %s6 = ssub.s32 1, %s4
  %s7 = scalar_select 0, %s6, %s4
  loop: start=0, step=1, limit=4
  $region2: #{conv_layer_forward.1} parent=0 // loop_pre_header
    _
  $region3: #{conv_layer_forward.1} parent=0 // loop_header
    %s9 = sphi 0, %s13
    %p10 = scmp.ge.s32.totalorder %s9, 4
    %s19 = sphi 0, %s21
    %s22 = sphi 0, %s19
    %s23 = sphi 0, %s22
    %s39 = sphi 0, %s23
    %s43 = sphi 0, %s43
    %s45 = sphi 0, %s43
    %s46 = sphi 0, %s45
    %s60 = sphi 0, %s46
    %s64 = sphi 0, %s64
    %s66 = sphi 0, %s64
    %s67 = sphi 0, %s66
    %s81 = sphi 0, %s67
    %s87 = sphi 0, %s89
    %s90 = sphi 0, %s87
    %s91 = sphi 0, %s90
    %s107 = sphi 0, %s91
  $region4: #{conv_layer_forward.1} parent=0 // loop_header_branch
    %12 = sbr.rel (%p10) target = $region8
  $region5: #{conv_layer_forward.1} parent=0 // loop_body
    %s14 = ssub.s32 %s9, 1
    %s15 = ssub.s32 %s9, 2
    %s16 = sadd.s32 %s9, 1
    %s17 = ssub.s32 %s9, %s16
    %p18 = scmp.eq.s32.totalorder %s17, 0
    %s20 = sadd.s32 %s19, 1
    %s21 = scalar_select %p18, %s19, %s20
    %p24 = pneg %p18
    %p25 = scmp.eq.s32.totalorder %s9, 1
    %p26 = por %p24, %p25
    %p27 = scmp.ne.s32.totalorder %s19, %s22
    %p28 = scmp.eq.s32.totalorder %s9, 0
    %p29 = por %p27, %p28
    %p30 = scmp.ne.s32.totalorder %s19, %s22
    %p31 = scmp.eq.s32.totalorder %s14, 1
    %p32 = por %p30, %p31
    %p33 = scmp.ne.s32.totalorder %s22, %s23
    %p34 = scmp.eq.s32.totalorder %s14, 0
    %p35 = por %p33, %p34
    %p36 = scmp.ne.s32.totalorder %s22, %s23
    %p37 = scmp.eq.s32.totalorder %s15, 1
    %p38 = por %p36, %p37
    %p40 = scmp.ne.s32.totalorder %s23, %s39
    %p41 = scmp.eq.s32.totalorder %s15, 0
    %p42 = por %p40, %p41
    %s44 = sadd.s32 %s43, 1
    %p47 = scmp.eq.s32.totalorder %s9, 1
    %p48 = scmp.ne.s32.totalorder %s43, %s45
    %p49 = scmp.eq.s32.totalorder %s9, 0
    %p50 = por %p48, %p49
    %p51 = scmp.ne.s32.totalorder %s43, %s45
    %p52 = scmp.eq.s32.totalorder %s14, 1
    %p53 = por %p51, %p52
    %p54 = scmp.ne.s32.totalorder %s45, %s46
    %p55 = scmp.eq.s32.totalorder %s14, 0
    %p56 = por %p54, %p55
    %p57 = scmp.ne.s32.totalorder %s45, %s46
    %p58 = scmp.eq.s32.totalorder %s15, 1
    %p59 = por %p57, %p58
    %p61 = scmp.ne.s32.totalorder %s46, %s60
    %p62 = scmp.eq.s32.totalorder %s15, 0
    %p63 = por %p61, %p62
    %s65 = sadd.s32 %s64, 1
    %p68 = scmp.eq.s32.totalorder %s9, 1
    %p69 = scmp.ne.s32.totalorder %s64, %s66
    %p70 = scmp.eq.s32.totalorder %s9, 0
    %p71 = por %p69, %p70
    %p72 = scmp.ne.s32.totalorder %s64, %s66
    %p73 = scmp.eq.s32.totalorder %s14, 1
    %p74 = por %p72, %p73
    %p75 = scmp.ne.s32.totalorder %s66, %s67
    %p76 = scmp.eq.s32.totalorder %s14, 0
    %p77 = por %p75, %p76
    %p78 = scmp.ne.s32.totalorder %s66, %s67
    %p79 = scmp.eq.s32.totalorder %s15, 1
    %p80 = por %p78, %p79
    %p82 = scmp.ne.s32.totalorder %s67, %s81
    %p83 = scmp.eq.s32.totalorder %s15, 0
    %p84 = por %p82, %p83
    %s85 = ssub.s32 %s9, %s16
    %p86 = scmp.eq.s32.totalorder %s85, 0
    %s88 = sadd.s32 %s87, 1
    %s89 = scalar_select %p86, %s87, %s88
    %p92 = pneg %p86
    %p93 = scmp.eq.s32.totalorder %s9, 1
    %p94 = por %p92, %p93
    %p95 = scmp.ne.s32.totalorder %s87, %s90
    %p96 = scmp.eq.s32.totalorder %s9, 0
    %p97 = por %p95, %p96
    %p98 = scmp.ne.s32.totalorder %s87, %s90
    %p99 = scmp.eq.s32.totalorder %s14, 1
    %p100 = por %p98, %p99
    %p101 = scmp.ne.s32.totalorder %s90, %s91
    %p102 = scmp.eq.s32.totalorder %s14, 0
    %p103 = por %p101, %p102
    %p104 = scmp.ne.s32.totalorder %s90, %s91
    %p105 = scmp.eq.s32.totalorder %s15, 1
    %p106 = por %p104, %p105
    %p108 = scmp.ne.s32.totalorder %s91, %s107
    %p109 = scmp.eq.s32.totalorder %s15, 0
    %p110 = por %p108, %p109
    %p111 = scmp.le.s32.totalorder 1, %s9
    %p112 = scmp.lt.s32.totalorder %s9, 3
    %p113 = pnand %p111, %p112
    %p114 = pneg %p113
    // Predicated region
    $region9: #{conv_layer_forward.1} parent=5 // pred_check
      _
    $region10: #{conv_layer_forward.1} parent=5 // pred_check_branch
      %116 = sbr.rel (%p113) target = $region12
    $region11: #{conv_layer_forward.1} parent=5 // pred_region
      %s117 = ssub.s32 %s9, 1
      // Predicated region
      $region13: #{conv_layer_forward.1} parent=11 // pred_check
        %p118 = pneg %p56
      $region14: #{conv_layer_forward.1} parent=11 // pred_check_branch
        %120 = sbr.rel (%p118) target = $region16
      $region15: #{conv_layer_forward.1} parent=11 // pred_region
        _
      $region16: #{conv_layer_forward.1} parent=11 // pred_fallthru
        _
      // Predicated region
      $region17: #{conv_layer_forward.1} parent=11 // pred_check
        %p121 = pneg %p77
      $region18: #{conv_layer_forward.1} parent=11 // pred_check_branch
        %123 = sbr.rel (%p121) target = $region20
      $region19: #{conv_layer_forward.1} parent=11 // pred_region
        _
      $region20: #{conv_layer_forward.1} parent=11 // pred_fallthru
        _
    $region12: #{conv_layer_forward.1} parent=5 // pred_fallthru
      _
    %p124 = scmp.lt.s32.totalorder %s9, 2
    // Predicated region
    $region21: #{conv_layer_forward.1} parent=5 // pred_check
      %p125 = pneg %p124
    $region22: #{conv_layer_forward.1} parent=5 // pred_check_branch
      %127 = sbr.rel (%p125) target = $region24
    $region23: #{conv_layer_forward.1} parent=5 // pred_region
      // Predicated region
      $region25: #{conv_layer_forward.1} parent=23 // pred_check
        %p128 = pneg %p29
      $region26: #{conv_layer_forward.1} parent=23 // pred_check_branch
        %130 = sbr.rel (%p128) target = $region28
      $region27: #{conv_layer_forward.1} parent=23 // pred_region
        %p131 = scmp.lt.s32.totalorder %s9, 1
        %s132 = scalar_select %p131, %s9, 1
        %s133 = smul.addr %s132, 3
        %s134 = smul.addr %s133, 8
        %s135 = scalar_lea.vmem %s0, %s134
      $region28: #{conv_layer_forward.1} parent=23 // pred_fallthru
        _
    $region24: #{conv_layer_forward.1} parent=5 // pred_fallthru
      _
    %p136 = scmp.le.s32.totalorder 1, %s9
    %p137 = scmp.lt.s32.totalorder %s9, 3
    %p138 = pnand %p136, %p137
    %p139 = pneg %p138
    // Predicated region
    $region29: #{conv_layer_forward.1} parent=5 // pred_check
      _
    $region30: #{conv_layer_forward.1} parent=5 // pred_check_branch
      %141 = sbr.rel (%p138) target = $region32
    $region31: #{conv_layer_forward.1} parent=5 // pred_region
      %s142 = ssub.s32 %s9, 1
      %p143 = scmp.lt.s32.totalorder %s14, 1
      %s144 = scalar_select %p143, %s14, 1
      %s145 = smul.addr %s144, 3
      %s146 = smul.addr %s145, 8
      %s147 = scalar_lea.vmem %s0, %s146
      %p148 = pneg %p35
      %p149 = pneg %p32
      %p150 = pneg %p56
      %p151 = pneg %p53
      %p152 = pneg %p77
      %p153 = pneg %p74
      %p154 = pneg %p103
      %p155 = pneg %p100
      %p156 = scmp.lt.s32.totalorder %s14, 1
      %s157 = scalar_select %p156, %s14, 1
      %s158 = smul.addr %s157, 2
      %s159 = smul.addr %s158, 8
      %s160 = scalar_lea.vmem %s3, %s159
      %p161 = scmp.lt.s32.totalorder %s14, 1
      %s162 = scalar_select %p161, %s14, 1
      %s163 = smul.addr %s162, 3
      %s164 = smul.addr %s163, 8
      %s165 = scalar_lea.vmem %s0, %s164
      %p166 = scmp.lt.s32.totalorder %s14, 1
      %s167 = scalar_select %p166, %s14, 1
      %s168 = smul.addr %s167, 2
      %s169 = smul.addr %s168, 8
      %s170 = scalar_lea.vmem %s3, %s169
      %v171 = vld [vmem:[%s165] sm:$0xff]
      %v172 = vld [vmem:[%s165 + $0x8] sm:$0xff]
      %v173 = vld [vmem:[%s165 + $0x10] sm:$0x3f]
      %v174 = vld [vmem:[%s1] sm:$0xf]
      %s175 = scalar_lea.vmem %s1, 4
      %v176 = vld [vmem:[%s175] sm:$0xf]
      %vm180 = vcmask 1046528
      %v181 = vrot.slane %v171, 1
      %v182 = vrot.slane %v172, 1
      %v183 = vsel %vm180, %v181, %v182
      %v184 = vrot.slane %v173, 1
      %v185 = vsel %vm180, %v182, %v184
      %vm186 = vcmask 31744
      %v187 = vsel %vm186, %v183, 0
      %v189 = vsel %vm186, %v185, 0
      %vm191 = vcmask 1043456
      %v193 = vsel %vm191, %v176, 0
      %195 = vmatprep.subr.mxu0 0.0
      %196 = vmatpush1.msra.mxu0 %v193
      %197 = vmatprep.subr.mxu0 0.0
      %198 = vmatpush1.msra.mxu0 0.0
      %199 = vmatprep.subr.mxu0 0.0
      %200 = vmatpush1.msra.mxu0 0.0
      %201 = vmatprep.subr.mxu0 0.0
      %202 = vmatpush1.msra.mxu0 0.0
      %203 = vmatprep.subr.mxu0 0.0
      %204 = vmatpush1.msra.mxu0 0.0
      %205 = vmatprep.subr.mxu0 0.0
      %206 = vmatpush1.msra.mxu0 0.0
      %207 = vmatprep.subr.mxu0 0.0
      %208 = vmatpush1.msra.mxu0 0.0
      %209 = vmatprep.subr.mxu0 0.0
      %210 = vmatpush1.msra.mxu0 0.0
      %211 = vmatprep.subr.mxu0 0.0
      %212 = vmatpush1.msra.mxu0 0.0
      %213 = vmatprep.subr.mxu0 0.0
      %214 = vmatpush1.msra.mxu0 0.0
      %215 = vmatprep.subr.mxu0 0.0
      %216 = vmatpush1.msra.mxu0 0.0
      %217 = vmatprep.subr.mxu0 0.0
      %218 = vmatpush1.msra.mxu0 0.0
      %219 = vmatprep.subr.mxu0 0.0
      %220 = vmatpush1.msra.mxu0 0.0
      %221 = vmatprep.subr.mxu0 0.0
      %222 = vmatpush1.msra.mxu0 0.0
      %223 = vmatprep.subr.mxu0 0.0
      %224 = vmatpush1.msra.mxu0 0.0
      %225 = vmatprep.subr.mxu0 0.0
      %226 = vmatpush1.msra.mxu0 0.0
      %227 = vmatprep.subr.mxu0 0.0
      %228 = vmatpush1.msra.mxu0 0.0
      %229 = vmatprep.subr.mxu0 0.0
      %230 = vmatpush1.msra.mxu0 0.0
      %231 = vmatprep.subr.mxu0 0.0
      %232 = vmatpush1.msra.mxu0 0.0
      %233 = vmatprep.subr.mxu0 0.0
      %234 = vmatpush1.msra.mxu0 0.0
      %235 = vmatprep.subr.mxu0 0.0
      %236 = vmatpush1.msra.mxu0 0.0
      %237 = vmatprep.subr.mxu0 0.0
      %238 = vmatpush1.msra.mxu0 0.0
      %239 = vmatprep.subr.mxu0 0.0
      %240 = vmatpush1.msra.mxu0 0.0
      %241 = vmatprep.subr.mxu0 0.0
      %242 = vmatpush1.msra.mxu0 0.0
      %243 = vmatprep.subr.mxu0 0.0
      %244 = vmatpush1.msra.mxu0 0.0
      %245 = vmatprep.subr.mxu0 0.0
      %246 = vmatpush1.msra.mxu0 0.0
      %247 = vmatprep.subr.mxu0 0.0
      %248 = vmatpush1.msra.mxu0 0.0
      %249 = vmatprep.subr.mxu0 0.0
      %250 = vmatpush1.msra.mxu0 0.0
      %251 = vmatprep.subr.mxu0 0.0
      %252 = vmatpush1.msra.mxu0 0.0
      %253 = vmatprep.subr.mxu0 0.0
      %254 = vmatpush1.msra.mxu0 0.0
      %255 = vmatprep.subr.mxu0 0.0
      %256 = vmatpush1.msra.mxu0 0.0
      %257 = vmatprep.subr.mxu0 0.0
      %258 = vmatpush1.msra.mxu0 0.0
      %259 = vmatprep.mubr.f32.mxu0 0.0
      %260 = vmatmul.mubr.f32.gmra.mrb[0].mxu0 %v187
      %v261 = vpop.f32.mrb[0].mxu0
      %v262 = vadd.f32 0.0, %v261
      %v263 = vpop.f32.mrb[0].mxu0
      %264 = vmatprep.mubr.f32.mxu0 0.0
      %265 = vmatmul.mubr.f32.gmra.mrb[0].mxu0 %v189
      %v266 = vpop.f32.mrb[0].mxu0
      %v267 = vadd.f32 0.0, %v266
      %v268 = vpop.f32.mrb[0].mxu0
      %269 = vdwg.mxu0
      %v270 = vsel %vm186, %v171, 0
      %v272 = vsel %vm186, %v172, 0
      %v275 = vsel %vm191, %v174, 0
      %277 = vmatprep.subr.mxu0 0.0
      %278 = vmatpush1.msra.mxu0 %v275
      %279 = vmatprep.subr.mxu0 0.0
      %280 = vmatpush1.msra.mxu0 0.0
      %281 = vmatprep.subr.mxu0 0.0
      %282 = vmatpush1.msra.mxu0 0.0
      %283 = vmatprep.subr.mxu0 0.0
      %284 = vmatpush1.msra.mxu0 0.0
      %285 = vmatprep.subr.mxu0 0.0
      %286 = vmatpush1.msra.mxu0 0.0
      %287 = vmatprep.subr.mxu0 0.0
      %288 = vmatpush1.msra.mxu0 0.0
      %289 = vmatprep.subr.mxu0 0.0
      %290 = vmatpush1.msra.mxu0 0.0
      %291 = vmatprep.subr.mxu0 0.0
      %292 = vmatpush1.msra.mxu0 0.0
      %293 = vmatprep.subr.mxu0 0.0
      %294 = vmatpush1.msra.mxu0 0.0
      %295 = vmatprep.subr.mxu0 0.0
      %296 = vmatpush1.msra.mxu0 0.0
      %297 = vmatprep.subr.mxu0 0.0
      %298 = vmatpush1.msra.mxu0 0.0
      %299 = vmatprep.subr.mxu0 0.0
      %300 = vmatpush1.msra.mxu0 0.0
      %301 = vmatprep.subr.mxu0 0.0
      %302 = vmatpush1.msra.mxu0 0.0
      %303 = vmatprep.subr.mxu0 0.0
      %304 = vmatpush1.msra.mxu0 0.0
      %305 = vmatprep.subr.mxu0 0.0
      %306 = vmatpush1.msra.mxu0 0.0
      %307 = vmatprep.subr.mxu0 0.0
      %308 = vmatpush1.msra.mxu0 0.0
      %309 = vmatprep.subr.mxu0 0.0
      %310 = vmatpush1.msra.mxu0 0.0
      %311 = vmatprep.subr.mxu0 0.0
      %312 = vmatpush1.msra.mxu0 0.0
      %313 = vmatprep.subr.mxu0 0.0
      %314 = vmatpush1.msra.mxu0 0.0
      %315 = vmatprep.subr.mxu0 0.0
      %316 = vmatpush1.msra.mxu0 0.0
      %317 = vmatprep.subr.mxu0 0.0
      %318 = vmatpush1.msra.mxu0 0.0
      %319 = vmatprep.subr.mxu0 0.0
      %320 = vmatpush1.msra.mxu0 0.0
      %321 = vmatprep.subr.mxu0 0.0
      %322 = vmatpush1.msra.mxu0 0.0
      %323 = vmatprep.subr.mxu0 0.0
      %324 = vmatpush1.msra.mxu0 0.0
      %325 = vmatprep.subr.mxu0 0.0
      %326 = vmatpush1.msra.mxu0 0.0
      %327 = vmatprep.subr.mxu0 0.0
      %328 = vmatpush1.msra.mxu0 0.0
      %329 = vmatprep.subr.mxu0 0.0
      %330 = vmatpush1.msra.mxu0 0.0
      %331 = vmatprep.subr.mxu0 0.0
      %332 = vmatpush1.msra.mxu0 0.0
      %333 = vmatprep.subr.mxu0 0.0
      %334 = vmatpush1.msra.mxu0 0.0
      %335 = vmatprep.subr.mxu0 0.0
      %336 = vmatpush1.msra.mxu0 0.0
      %337 = vmatprep.subr.mxu0 0.0
      %338 = vmatpush1.msra.mxu0 0.0
      %339 = vmatprep.subr.mxu0 0.0
      %340 = vmatpush1.msra.mxu0 0.0
      %341 = vmatprep.mubr.f32.mxu0 0.0
      %342 = vmatmul.mubr.f32.gmra.mrb[0].mxu0 %v270
      %v343 = vpop.f32.mrb[0].mxu0
      %v344 = vadd.f32 %v262, %v343
      %v345 = vpop.f32.mrb[0].mxu0
      %346 = vmatprep.mubr.f32.mxu0 0.0
      %347 = vmatmul.mubr.f32.gmra.mrb[0].mxu0 %v272
      %v348 = vpop.f32.mrb[0].mxu0
      %v349 = vadd.f32 %v267, %v348
      %v350 = vpop.f32.mrb[0].mxu0
      %351 = vdwg.mxu0
      %s352 = scalar_lea.vmem %s1, 8
      %v353 = vld [vmem:[%s352] sm:$0xf]
      %vm354 = vcmask 1045504
      %v355 = vrot.slane %v171, 2
      %v356 = vrot.slane %v172, 2
      %v357 = vsel %vm354, %v355, %v356
      %v358 = vrot.slane %v173, 2
      %v359 = vsel %vm354, %v356, %v358
      %v360 = vsel %vm186, %v357, 0
      %v362 = vsel %vm186, %v359, 0
      %v365 = vsel %vm191, %v353, 0
      %367 = vmatprep.subr.mxu0 0.0
      %368 = vmatpush1.msra.mxu0 %v365
      %369 = vmatprep.subr.mxu0 0.0
      %370 = vmatpush1.msra.mxu0 0.0
      %371 = vmatprep.subr.mxu0 0.0
      %372 = vmatpush1.msra.mxu0 0.0
      %373 = vmatprep.subr.mxu0 0.0
      %374 = vmatpush1.msra.mxu0 0.0
      %375 = vmatprep.subr.mxu0 0.0
      %376 = vmatpush1.msra.mxu0 0.0
      %377 = vmatprep.subr.mxu0 0.0
      %378 = vmatpush1.msra.mxu0 0.0
      %379 = vmatprep.subr.mxu0 0.0
      %380 = vmatpush1.msra.mxu0 0.0
      %381 = vmatprep.subr.mxu0 0.0
      %382 = vmatpush1.msra.mxu0 0.0
      %383 = vmatprep.subr.mxu0 0.0
      %384 = vmatpush1.msra.mxu0 0.0
      %385 = vmatprep.subr.mxu0 0.0
      %386 = vmatpush1.msra.mxu0 0.0
      %387 = vmatprep.subr.mxu0 0.0
      %388 = vmatpush1.msra.mxu0 0.0
      %389 = vmatprep.subr.mxu0 0.0
      %390 = vmatpush1.msra.mxu0 0.0
      %391 = vmatprep.subr.mxu0 0.0
      %392 = vmatpush1.msra.mxu0 0.0
      %393 = vmatprep.subr.mxu0 0.0
      %394 = vmatpush1.msra.mxu0 0.0
      %395 = vmatprep.subr.mxu0 0.0
      %396 = vmatpush1.msra.mxu0 0.0
      %397 = vmatprep.subr.mxu0 0.0
      %398 = vmatpush1.msra.mxu0 0.0
      %399 = vmatprep.subr.mxu0 0.0
      %400 = vmatpush1.msra.mxu0 0.0
      %401 = vmatprep.subr.mxu0 0.0
      %402 = vmatpush1.msra.mxu0 0.0
      %403 = vmatprep.subr.mxu0 0.0
      %404 = vmatpush1.msra.mxu0 0.0
      %405 = vmatprep.subr.mxu0 0.0
      %406 = vmatpush1.msra.mxu0 0.0
      %407 = vmatprep.subr.mxu0 0.0
      %408 = vmatpush1.msra.mxu0 0.0
      %409 = vmatprep.subr.mxu0 0.0
      %410 = vmatpush1.msra.mxu0 0.0
      %411 = vmatprep.subr.mxu0 0.0
      %412 = vmatpush1.msra.mxu0 0.0
      %413 = vmatprep.subr.mxu0 0.0
      %414 = vmatpush1.msra.mxu0 0.0
      %415 = vmatprep.subr.mxu0 0.0
      %416 = vmatpush1.msra.mxu0 0.0
      %417 = vmatprep.subr.mxu0 0.0
      %418 = vmatpush1.msra.mxu0 0.0
      %419 = vmatprep.subr.mxu0 0.0
      %420 = vmatpush1.msra.mxu0 0.0
      %421 = vmatprep.subr.mxu0 0.0
      %422 = vmatpush1.msra.mxu0 0.0
      %423 = vmatprep.subr.mxu0 0.0
      %424 = vmatpush1.msra.mxu0 0.0
      %425 = vmatprep.subr.mxu0 0.0
      %426 = vmatpush1.msra.mxu0 0.0
      %427 = vmatprep.subr.mxu0 0.0
      %428 = vmatpush1.msra.mxu0 0.0
      %429 = vmatprep.subr.mxu0 0.0
      %430 = vmatpush1.msra.mxu0 0.0
      %431 = vmatprep.mubr.f32.mxu0 0.0
      %432 = vmatmul.mubr.f32.gmra.mrb[0].mxu0 %v360
      %v433 = vpop.f32.mrb[0].mxu0
      %v434 = vadd.f32 0.0, %v433
      %v435 = vpop.f32.mrb[0].mxu0
      %436 = vmatprep.mubr.f32.mxu0 0.0
      %437 = vmatmul.mubr.f32.gmra.mrb[0].mxu0 %v362
      %v438 = vpop.f32.mrb[0].mxu0
      %v439 = vadd.f32 0.0, %v438
      %v440 = vpop.f32.mrb[0].mxu0
      %441 = vdwg.mxu0
      %v442 = vadd.f32 %v344, %v434
      %v443 = vadd.f32 %v349, %v439
      %s444 = scalar_lea.vmem %s1, 12
      %v445 = vld [vmem:[%s444] sm:$0xf]
      %vm446 = vcmask 1044480
      %v447 = vrot.slane %v171, 3
      %v448 = vrot.slane %v172, 3
      %v449 = vsel %vm446, %v447, %v448
      %v450 = vrot.slane %v173, 3
      %v451 = vsel %vm446, %v448, %v450
      %v452 = vsel %vm186, %v449, 0
      %v454 = vsel %vm186, %v451, 0
      %v457 = vsel %vm191, %v445, 0
      %459 = vmatprep.subr.mxu0 0.0
      %460 = vmatpush1.msra.mxu0 %v457
      %461 = vmatprep.subr.mxu0 0.0
      %462 = vmatpush1.msra.mxu0 0.0
      %463 = vmatprep.subr.mxu0 0.0
      %464 = vmatpush1.msra.mxu0 0.0
      %465 = vmatprep.subr.mxu0 0.0
      %466 = vmatpush1.msra.mxu0 0.0
      %467 = vmatprep.subr.mxu0 0.0
      %468 = vmatpush1.msra.mxu0 0.0
      %469 = vmatprep.subr.mxu0 0.0
      %470 = vmatpush1.msra.mxu0 0.0
      %471 = vmatprep.subr.mxu0 0.0
      %472 = vmatpush1.msra.mxu0 0.0
      %473 = vmatprep.subr.mxu0 0.0
      %474 = vmatpush1.msra.mxu0 0.0
      %475 = vmatprep.subr.mxu0 0.0
      %476 = vmatpush1.msra.mxu0 0.0
      %477 = vmatprep.subr.mxu0 0.0
      %478 = vmatpush1.msra.mxu0 0.0
      %479 = vmatprep.subr.mxu0 0.0
      %480 = vmatpush1.msra.mxu0 0.0
      %481 = vmatprep.subr.mxu0 0.0
      %482 = vmatpush1.msra.mxu0 0.0
      %483 = vmatprep.subr.mxu0 0.0
      %484 = vmatpush1.msra.mxu0 0.0
      %485 = vmatprep.subr.mxu0 0.0
      %486 = vmatpush1.msra.mxu0 0.0
      %487 = vmatprep.subr.mxu0 0.0
      %488 = vmatpush1.msra.mxu0 0.0
      %489 = vmatprep.subr.mxu0 0.0
      %490 = vmatpush1.msra.mxu0 0.0
      %491 = vmatprep.subr.mxu0 0.0
      %492 = vmatpush1.msra.mxu0 0.0
      %493 = vmatprep.subr.mxu0 0.0
      %494 = vmatpush1.msra.mxu0 0.0
      %495 = vmatprep.subr.mxu0 0.0
      %496 = vmatpush1.msra.mxu0 0.0
      %497 = vmatprep.subr.mxu0 0.0
      %498 = vmatpush1.msra.mxu0 0.0
      %499 = vmatprep.subr.mxu0 0.0
      %500 = vmatpush1.msra.mxu0 0.0
      %501 = vmatprep.subr.mxu0 0.0
      %502 = vmatpush1.msra.mxu0 0.0
      %503 = vmatprep.subr.mxu0 0.0
      %504 = vmatpush1.msra.mxu0 0.0
      %505 = vmatprep.subr.mxu0 0.0
      %506 = vmatpush1.msra.mxu0 0.0
      %507 = vmatprep.subr.mxu0 0.0
      %508 = vmatpush1.msra.mxu0 0.0
      %509 = vmatprep.subr.mxu0 0.0
      %510 = vmatpush1.msra.mxu0 0.0
      %511 = vmatprep.subr.mxu0 0.0
      %512 = vmatpush1.msra.mxu0 0.0
      %513 = vmatprep.subr.mxu0 0.0
      %514 = vmatpush1.msra.mxu0 0.0
      %515 = vmatprep.subr.mxu0 0.0
      %516 = vmatpush1.msra.mxu0 0.0
      %517 = vmatprep.subr.mxu0 0.0
      %518 = vmatpush1.msra.mxu0 0.0
      %519 = vmatprep.subr.mxu0 0.0
      %520 = vmatpush1.msra.mxu0 0.0
      %521 = vmatprep.subr.mxu0 0.0
      %522 = vmatpush1.msra.mxu0 0.0
      %523 = vmatprep.mubr.f32.mxu0 0.0
      %524 = vmatmul.mubr.f32.gmra.mrb[0].mxu0 %v452
      %v525 = vpop.f32.mrb[0].mxu0
      %v526 = vadd.f32 0.0, %v525
      %v527 = vpop.f32.mrb[0].mxu0
      %528 = vmatprep.mubr.f32.mxu0 0.0
      %529 = vmatmul.mubr.f32.gmra.mrb[0].mxu0 %v454
      %v530 = vpop.f32.mrb[0].mxu0
      %v531 = vadd.f32 0.0, %v530
      %v532 = vpop.f32.mrb[0].mxu0
      %533 = vdwg.mxu0
      %v534 = vadd.f32 %v442, %v526
      %v535 = vadd.f32 %v443, %v531
      %s536 = scalar_lea.vmem %s1, 16
      %v537 = vld [vmem:[%s536] sm:$0xf]
      %v538 = vrot.slane %v171, 4
      %v539 = vrot.slane %v172, 4
      %v540 = vsel %vm191, %v538, %v539
      %v541 = vrot.slane %v173, 4
      %v542 = vsel %vm191, %v539, %v541
      %v543 = vsel %vm186, %v540, 0
      %v545 = vsel %vm186, %v542, 0
      %v548 = vsel %vm191, %v537, 0
      %550 = vmatprep.subr.mxu0 0.0
      %551 = vmatpush1.msra.mxu0 %v548
      %552 = vmatprep.subr.mxu0 0.0
      %553 = vmatpush1.msra.mxu0 0.0
      %554 = vmatprep.subr.mxu0 0.0
      %555 = vmatpush1.msra.mxu0 0.0
      %556 = vmatprep.subr.mxu0 0.0
      %557 = vmatpush1.msra.mxu0 0.0
      %558 = vmatprep.subr.mxu0 0.0
      %559 = vmatpush1.msra.mxu0 0.0
      %560 = vmatprep.subr.mxu0 0.0
      %561 = vmatpush1.msra.mxu0 0.0
      %562 = vmatprep.subr.mxu0 0.0
      %563 = vmatpush1.msra.mxu0 0.0
      %564 = vmatprep.subr.mxu0 0.0
      %565 = vmatpush1.msra.mxu0 0.0
      %566 = vmatprep.subr.mxu0 0.0
      %567 = vmatpush1.msra.mxu0 0.0
      %568 = vmatprep.subr.mxu0 0.0
      %569 = vmatpush1.msra.mxu0 0.0
      %570 = vmatprep.subr.mxu0 0.0
      %571 = vmatpush1.msra.mxu0 0.0
      %572 = vmatprep.subr.mxu0 0.0
      %573 = vmatpush1.msra.mxu0 0.0
      %574 = vmatprep.subr.mxu0 0.0
      %575 = vmatpush1.msra.mxu0 0.0
      %576 = vmatprep.subr.mxu0 0.0
      %577 = vmatpush1.msra.mxu0 0.0
      %578 = vmatprep.subr.mxu0 0.0
      %579 = vmatpush1.msra.mxu0 0.0
      %580 = vmatprep.subr.mxu0 0.0
      %581 = vmatpush1.msra.mxu0 0.0
      %582 = vmatprep.subr.mxu0 0.0
      %583 = vmatpush1.msra.mxu0 0.0
      %584 = vmatprep.subr.mxu0 0.0
      %585 = vmatpush1.msra.mxu0 0.0
      %586 = vmatprep.subr.mxu0 0.0
      %587 = vmatpush1.msra.mxu0 0.0
      %588 = vmatprep.subr.mxu0 0.0
      %589 = vmatpush1.msra.mxu0 0.0
      %590 = vmatprep.subr.mxu0 0.0
      %591 = vmatpush1.msra.mxu0 0.0
      %592 = vmatprep.subr.mxu0 0.0
      %593 = vmatpush1.msra.mxu0 0.0
      %594 = vmatprep.subr.mxu0 0.0
      %595 = vmatpush1.msra.mxu0 0.0
      %596 = vmatprep.subr.mxu0 0.0
      %597 = vmatpush1.msra.mxu0 0.0
      %598 = vmatprep.subr.mxu0 0.0
      %599 = vmatpush1.msra.mxu0 0.0
      %600 = vmatprep.subr.mxu0 0.0
      %601 = vmatpush1.msra.mxu0 0.0
      %602 = vmatprep.subr.mxu0 0.0
      %603 = vmatpush1.msra.mxu0 0.0
      %604 = vmatprep.subr.mxu0 0.0
      %605 = vmatpush1.msra.mxu0 0.0
      %606 = vmatprep.subr.mxu0 0.0
      %607 = vmatpush1.msra.mxu0 0.0
      %608 = vmatprep.subr.mxu0 0.0
      %609 = vmatpush1.msra.mxu0 0.0
      %610 = vmatprep.subr.mxu0 0.0
      %611 = vmatpush1.msra.mxu0 0.0
      %612 = vmatprep.subr.mxu0 0.0
      %613 = vmatpush1.msra.mxu0 0.0
      %614 = vmatprep.mubr.f32.mxu0 0.0
      %615 = vmatmul.mubr.f32.gmra.mrb[0].mxu0 %v543
      %v616 = vpop.f32.mrb[0].mxu0
      %v617 = vadd.f32 0.0, %v616
      %v618 = vpop.f32.mrb[0].mxu0
      %619 = vmatprep.mubr.f32.mxu0 0.0
      %620 = vmatmul.mubr.f32.gmra.mrb[0].mxu0 %v545
      %v621 = vpop.f32.mrb[0].mxu0
      %v622 = vadd.f32 0.0, %v621
      %v623 = vpop.f32.mrb[0].mxu0
      %624 = vdwg.mxu0
      %v625 = vadd.f32 %v534, %v617
      %v626 = vadd.f32 %v535, %v622
      %s627 = scalar_lea.vmem %s1, 20
      %v628 = vld [vmem:[%s627] sm:$0xf]
      %vm629 = vcmask 1042432
      %v630 = vrot.slane %v171, 5
      %v631 = vrot.slane %v172, 5
      %v632 = vsel %vm629, %v630, %v631
      %v633 = vrot.slane %v173, 5
      %v634 = vsel %vm629, %v631, %v633
      %v635 = vsel %vm186, %v632, 0
      %v637 = vsel %vm186, %v634, 0
      %v640 = vsel %vm191, %v628, 0
      %642 = vmatprep.subr.mxu0 0.0
      %643 = vmatpush1.msra.mxu0 %v640
      %644 = vmatprep.subr.mxu0 0.0
      %645 = vmatpush1.msra.mxu0 0.0
      %646 = vmatprep.subr.mxu0 0.0
      %647 = vmatpush1.msra.mxu0 0.0
      %648 = vmatprep.subr.mxu0 0.0
      %649 = vmatpush1.msra.mxu0 0.0
      %650 = vmatprep.subr.mxu0 0.0
      %651 = vmatpush1.msra.mxu0 0.0
      %652 = vmatprep.subr.mxu0 0.0
      %653 = vmatpush1.msra.mxu0 0.0
      %654 = vmatprep.subr.mxu0 0.0
      %655 = vmatpush1.msra.mxu0 0.0
      %656 = vmatprep.subr.mxu0 0.0
      %657 = vmatpush1.msra.mxu0 0.0
      %658 = vmatprep.subr.mxu0 0.0
      %659 = vmatpush1.msra.mxu0 0.0
      %660 = vmatprep.subr.mxu0 0.0
      %661 = vmatpush1.msra.mxu0 0.0
      %662 = vmatprep.subr.mxu0 0.0
      %663 = vmatpush1.msra.mxu0 0.0
      %664 = vmatprep.subr.mxu0 0.0
      %665 = vmatpush1.msra.mxu0 0.0
      %666 = vmatprep.subr.mxu0 0.0
      %667 = vmatpush1.msra.mxu0 0.0
      %668 = vmatprep.subr.mxu0 0.0
      %669 = vmatpush1.msra.mxu0 0.0
      %670 = vmatprep.subr.mxu0 0.0
      %671 = vmatpush1.msra.mxu0 0.0
      %672 = vmatprep.subr.mxu0 0.0
      %673 = vmatpush1.msra.mxu0 0.0
      %674 = vmatprep.subr.mxu0 0.0
      %675 = vmatpush1.msra.mxu0 0.0
      %676 = vmatprep.subr.mxu0 0.0
      %677 = vmatpush1.msra.mxu0 0.0
      %678 = vmatprep.subr.mxu0 0.0
      %679 = vmatpush1.msra.mxu0 0.0
      %680 = vmatprep.subr.mxu0 0.0
      %681 = vmatpush1.msra.mxu0 0.0
      %682 = vmatprep.subr.mxu0 0.0
      %683 = vmatpush1.msra.mxu0 0.0
      %684 = vmatprep.subr.mxu0 0.0
      %685 = vmatpush1.msra.mxu0 0.0
      %686 = vmatprep.subr.mxu0 0.0
      %687 = vmatpush1.msra.mxu0 0.0
      %688 = vmatprep.subr.mxu0 0.0
      %689 = vmatpush1.msra.mxu0 0.0
      %690 = vmatprep.subr.mxu0 0.0
      %691 = vmatpush1.msra.mxu0 0.0
      %692 = vmatprep.subr.mxu0 0.0
      %693 = vmatpush1.msra.mxu0 0.0
      %694 = vmatprep.subr.mxu0 0.0
      %695 = vmatpush1.msra.mxu0 0.0
      %696 = vmatprep.subr.mxu0 0.0
      %697 = vmatpush1.msra.mxu0 0.0
      %698 = vmatprep.subr.mxu0 0.0
      %699 = vmatpush1.msra.mxu0 0.0
      %700 = vmatprep.subr.mxu0 0.0
      %701 = vmatpush1.msra.mxu0 0.0
      %702 = vmatprep.subr.mxu0 0.0
      %703 = vmatpush1.msra.mxu0 0.0
      %704 = vmatprep.subr.mxu0 0.0
      %705 = vmatpush1.msra.mxu0 0.0
      %706 = vmatprep.mubr.f32.mxu0 0.0
      %707 = vmatmul.mubr.f32.gmra.mrb[0].mxu0 %v635
      %v708 = vpop.f32.mrb[0].mxu0
      %v709 = vadd.f32 0.0, %v708
      %v710 = vpop.f32.mrb[0].mxu0
      %711 = vmatprep.mubr.f32.mxu0 0.0
      %712 = vmatmul.mubr.f32.gmra.mrb[0].mxu0 %v637
      %v713 = vpop.f32.mrb[0].mxu0
      %v714 = vadd.f32 0.0, %v713
      %v715 = vpop.f32.mrb[0].mxu0
      %716 = vdwg.mxu0
      %v717 = vadd.f32 %v625, %v709
      %v718 = vadd.f32 %v626, %v714
      %s719 = scalar_lea.vmem %s1, 24
      %v720 = vld [vmem:[%s719] sm:$0xf]
      %vm721 = vcmask 1041408
      %v722 = vrot.slane %v171, 6
      %v723 = vrot.slane %v172, 6
      %v724 = vsel %vm721, %v722, %v723
      %v725 = vrot.slane %v173, 6
      %v726 = vsel %vm721, %v723, %v725
      %v727 = vsel %vm186, %v724, 0
      %v729 = vsel %vm186, %v726, 0
      %v732 = vsel %vm191, %v720, 0
      %734 = vmatprep.subr.mxu0 0.0
      %735 = vmatpush1.msra.mxu0 %v732
      %736 = vmatprep.subr.mxu0 0.0
      %737 = vmatpush1.msra.mxu0 0.0
      %738 = vmatprep.subr.mxu0 0.0
      %739 = vmatpush1.msra.mxu0 0.0
      %740 = vmatprep.subr.mxu0 0.0
      %741 = vmatpush1.msra.mxu0 0.0
      %742 = vmatprep.subr.mxu0 0.0
      %743 = vmatpush1.msra.mxu0 0.0
      %744 = vmatprep.subr.mxu0 0.0
      %745 = vmatpush1.msra.mxu0 0.0
      %746 = vmatprep.subr.mxu0 0.0
      %747 = vmatpush1.msra.mxu0 0.0
      %748 = vmatprep.subr.mxu0 0.0
      %749 = vmatpush1.msra.mxu0 0.0
      %750 = vmatprep.subr.mxu0 0.0
      %751 = vmatpush1.msra.mxu0 0.0
      %752 = vmatprep.subr.mxu0 0.0
      %753 = vmatpush1.msra.mxu0 0.0
      %754 = vmatprep.subr.mxu0 0.0
      %755 = vmatpush1.msra.mxu0 0.0
      %756 = vmatprep.subr.mxu0 0.0
      %757 = vmatpush1.msra.mxu0 0.0
      %758 = vmatprep.subr.mxu0 0.0
      %759 = vmatpush1.msra.mxu0 0.0
      %760 = vmatprep.subr.mxu0 0.0
      %761 = vmatpush1.msra.mxu0 0.0
      %762 = vmatprep.subr.mxu0 0.0
      %763 = vmatpush1.msra.mxu0 0.0
      %764 = vmatprep.subr.mxu0 0.0
      %765 = vmatpush1.msra.mxu0 0.0
      %766 = vmatprep.subr.mxu0 0.0
      %767 = vmatpush1.msra.mxu0 0.0
      %768 = vmatprep.subr.mxu0 0.0
      %769 = vmatpush1.msra.mxu0 0.0
      %770 = vmatprep.subr.mxu0 0.0
      %771 = vmatpush1.msra.mxu0 0.0
      %772 = vmatprep.subr.mxu0 0.0
      %773 = vmatpush1.msra.mxu0 0.0
      %774 = vmatprep.subr.mxu0 0.0
      %775 = vmatpush1.msra.mxu0 0.0
      %776 = vmatprep.subr.mxu0 0.0
      %777 = vmatpush1.msra.mxu0 0.0
      %778 = vmatprep.subr.mxu0 0.0
      %779 = vmatpush1.msra.mxu0 0.0
      %780 = vmatprep.subr.mxu0 0.0
      %781 = vmatpush1.msra.mxu0 0.0
      %782 = vmatprep.subr.mxu0 0.0
      %783 = vmatpush1.msra.mxu0 0.0
      %784 = vmatprep.subr.mxu0 0.0
      %785 = vmatpush1.msra.mxu0 0.0
      %786 = vmatprep.subr.mxu0 0.0
      %787 = vmatpush1.msra.mxu0 0.0
      %788 = vmatprep.subr.mxu0 0.0
      %789 = vmatpush1.msra.mxu0 0.0
      %790 = vmatprep.subr.mxu0 0.0
      %791 = vmatpush1.msra.mxu0 0.0
      %792 = vmatprep.subr.mxu0 0.0
      %793 = vmatpush1.msra.mxu0 0.0
      %794 = vmatprep.subr.mxu0 0.0
      %795 = vmatpush1.msra.mxu0 0.0
      %796 = vmatprep.subr.mxu0 0.0
      %797 = vmatpush1.msra.mxu0 0.0
      %798 = vmatprep.mubr.f32.mxu0 0.0
      %799 = vmatmul.mubr.f32.gmra.mrb[0].mxu0 %v727
      %v800 = vpop.f32.mrb[0].mxu0
      %v801 = vadd.f32 0.0, %v800
      %v802 = vpop.f32.mrb[0].mxu0
      %803 = vmatprep.mubr.f32.mxu0 0.0
      %804 = vmatmul.mubr.f32.gmra.mrb[0].mxu0 %v729
      %v805 = vpop.f32.mrb[0].mxu0
      %v806 = vadd.f32 0.0, %v805
      %v807 = vpop.f32.mrb[0].mxu0
      %808 = vdwg.mxu0
      %v809 = vadd.f32 %v717, %v801
      %v810 = vadd.f32 %v718, %v806
      %v811 = vld [vmem:[%s2] sm:$0x1]
      %v813 = vlaneseq
      %v814 = vshrl.u32 %v813, 7
      %v815 = vsub.s32 0, %v814
      %v816 = vrot.slane %v811, %v815
      %v818 = vadd.f32 %v809, %v816
      %v819 = vadd.f32 %v810, %v816
      %vm820 = vcmp.ge.f32.partialorder %v818, 0.0
      %vm821 = vcmp.ge.f32.partialorder %v819, 0.0
      %v822 = vmul.f32 %v818, 0.01
      %v823 = vmul.f32 %v819, 0.01
      %v824 = vsel %vm820, %v818, %v822
      %v825 = vsel %vm821, %v819, %v823
      %826 = vst.msk [vmem:[%s170] sm:$0xff] %vm186, %v824
      %827 = vst.msk [vmem:[%s170 + $0x8] sm:$0xff] %vm186, %v825
      %p828 = scmp.lt.s32.totalorder %s14, 1
      %s829 = scalar_select %p828, %s14, 1
      %s830 = smul.addr %s829, 2
      %s831 = smul.addr %s830, 8
      %s832 = scalar_lea.vmem %s3, %s831
      // Predicated region
      $region33: #{conv_layer_forward.1} parent=31 // pred_check
        %p833 = pneg %p100
      $region34: #{conv_layer_forward.1} parent=31 // pred_check_branch
        %835 = sbr.rel (%p833) target = $region36
      $region35: #{conv_layer_forward.1} parent=31 // pred_region
        _
      $region36: #{conv_layer_forward.1} parent=31 // pred_fallthru
        _
    $region32: #{conv_layer_forward.1} parent=5 // pred_fallthru
      _
    %p836 = scmp.le.s32.totalorder 2, %s9
    // Predicated region
    $region37: #{conv_layer_forward.1} parent=5 // pred_check
      %p837 = pneg %p836
    $region38: #{conv_layer_forward.1} parent=5 // pred_check_branch
      %839 = sbr.rel (%p837) target = $region40
    $region39: #{conv_layer_forward.1} parent=5 // pred_region
      %s840 = ssub.s32 %s9, 2
      // Predicated region
      $region41: #{conv_layer_forward.1} parent=39 // pred_check
        %p841 = pneg %p106
      $region42: #{conv_layer_forward.1} parent=39 // pred_check_branch
        %843 = sbr.rel (%p841) target = $region44
      $region43: #{conv_layer_forward.1} parent=39 // pred_region
        %p844 = scmp.lt.s32.totalorder %s15, 1
        %s845 = scalar_select %p844, %s15, 1
        %s846 = smul.addr %s845, 2
        %s847 = smul.addr %s846, 8
        %s848 = scalar_lea.vmem %s3, %s847
      $region44: #{conv_layer_forward.1} parent=39 // pred_fallthru
        _
    $region40: #{conv_layer_forward.1} parent=5 // pred_fallthru
      _
  $region6: #{conv_layer_forward.1} parent=0 // loop_footer
    %s13 = sadd.s32 1, %s9
  $region7: #{conv_layer_forward.1} parent=0 // loop_footer_branch
    %8 = sbr.rel target = $region3
  $region8: #{conv_layer_forward.1} parent=0 // loop_exit
    _

</llo_original>
